<compile_context>
chip_gen: v7x
topology: tpu7x:2x2x1
jax: 0.10.0
libtpu: 0.0.40
codegen_flags: <defaults>
</compile_context>

<pallas_src>
import jax
import jax.numpy as jnp
from jax.experimental import pallas as pl
from jax.experimental.pallas import tpu as pltpu

_LANES = 128


def _round_up(x, m):
    return ((x + m - 1) // m) * m


# ---------- one-time capability probes --------------------------------------
def _probe_buffered():
    try:
        pl.BlockSpec((8, _LANES), lambda i: (0, 0), pipeline_mode=pl.Buffered(1))
        return True
    except Exception:
        return False


_HAS_BUFFERED = _probe_buffered()
# If Buffered(1) is unavailable, grid-invariant operands fall back to default
# double buffering -> count them twice in the VMEM budget.
_CONST_BUF_FACTOR = 1 if _HAS_BUFFERED else 2


def _const_spec(shape):
    """BlockSpec for a grid-invariant operand (resident weights / biases)."""
    index_map = lambda *_: (0,) * len(shape)
    if _HAS_BUFFERED:
        return pl.BlockSpec(shape, index_map, pipeline_mode=pl.Buffered(1))
    return pl.BlockSpec(shape, index_map)


def _vmem_cap_bytes():
    """Usable VMEM budget for this chip generation (with headroom)."""
    try:
        info = pltpu.get_tpu_info()
        phys = getattr(info, "vmem_capacity_bytes", None) or (64 << 20)
    except Exception:
        phys = 64 << 20                      # conservative (v7x-sized) fallback
    # ~18% headroom for Mosaic internal scratch: ~52 MiB on v7x, ~104 MiB v5e/v6e.
    return (phys * 13) // 16


# ---------- kernel -----------------------------------------------------------
def _head_kernel(x_ref, w1_ref, b1_ref, w2_ref, b2_ref, o_ref, acc_ref):
    k = pl.program_id(1)                     # hid-chunk axis ("arbitrary")

    @pl.when(k == 0)
    def _():
        acc_ref[...] = jnp.zeros_like(acc_ref)

    # hidden chunk = relu(x @ W1[:, chunk] + b1[chunk]); MXU with f32 accumulate.
    h = jnp.dot(x_ref[...], w1_ref[...], preferred_element_type=jnp.float32)
    h = jnp.maximum(h + b1_ref[...], 0.0)    # bias + ReLU on the VPU, f32
    # Dropout(p=0.0) is the identity -> nothing to do.
    # logits += hidden_chunk @ W2[chunk, :]
    acc_ref[...] += jnp.dot(h.astype(w2_ref.dtype), w2_ref[...],
                            preferred_element_type=jnp.float32)

    @pl.when(k == pl.num_programs(1) - 1)
    def _():
        o_ref[...] = (acc_ref[...] + b2_ref[...]).astype(o_ref.dtype)


# ---------- parameter preparation (hoist out of the hot path) ---------------
def prepare_head_params(w1, b1, w2, b2, matmul_dtype=jnp.bfloat16):
    """One-time cast + lane-padding of the head parameters."""
    in_dim, hid_dim = w1.shape
    out_dim = w2.shape[1]
    out_pad = _round_up(out_dim, _LANES)     # lane-dense output (unmasked vst)
    w1c = w1.astype(matmul_dtype)
    w2c = w2.astype(matmul_dtype)
    b2p = b2
    if out_pad != out_dim:
        w2c = jnp.pad(w2c, ((0, 0), (0, out_pad - out_dim)))
        b2p = jnp.pad(b2, (0, out_pad - out_dim))
    return dict(
        w1=w1c,
        b1=b1.reshape(1, hid_dim).astype(jnp.float32),
        w2=w2c,
        b2=b2p.reshape(1, out_pad).astype(jnp.float32),
        in_dim=in_dim, hid_dim=hid_dim, out_dim=out_dim, out_pad=out_pad,
        matmul_dtype=jnp.dtype(matmul_dtype))


# ---------- tiling heuristics ------------------------------------------------
def _row_align(mm_bytes):
    # Packed-row alignment: f32 -> 8, bf16 -> 16, 8-bit -> 32.
    return {4: 8, 2: 16, 1: 32}.get(mm_bytes, 8)


def _pick_batch_tile(B, batch_tile, mm_bytes):
    align = _row_align(mm_bytes)
    if B <= batch_tile:
        return B                              # one grid step on the batch axis
    tb = _round_up(batch_tile, align)
    if B % tb != 0:
        # Prefer a tile that divides B so the last output store stays unmasked.
        cand = tb
        while cand >= max(align, tb // 2):
            if B % cand == 0:
                return cand
            cand -= align
    return tb


def _pick_hid_chunk(hid_dim, in_dim, out_pad, mm_bytes, cap, hid_chunk):
    if hid_chunk is not None:
        return hid_chunk
    w_bytes = (in_dim * hid_dim + hid_dim * out_pad) * mm_bytes
    if w_bytes * _CONST_BUF_FACTOR <= cap // 3 or hid_dim % _LANES != 0:
        return hid_dim                        # keep W1/W2 fully resident
    # Stream W1/W2: largest multiple of 128 dividing hid_dim whose
    # double-buffered per-chunk weights stay under ~cap/3.
    per_unit = (in_dim + out_pad) * mm_bytes * 2
    best = _LANES
    th = _LANES
    while th <= hid_dim:
        if hid_dim % th == 0 and per_unit * th <= cap // 3:
            best = th
        th += _LANES
    return best


# ---------- main entry points ------------------------------------------------
def sequence_classification_head_prepared(pooled_output, params, *,
                                           batch_tile=512,
                                           hid_chunk=None,
                                           min_pallas_batch=256,
                                           force_pallas=False):
    """Forward of SequenceClassificationHead (num_layer=1, dropout=0.0)."""
    B, in_dim = pooled_output.shape
    assert in_dim == params["in_dim"]
    hid_dim, out_dim, out_pad = params["hid_dim"], params["out_dim"], params["out_pad"]
    mm_dtype = params["matmul_dtype"]
    out_dtype = pooled_output.dtype

    if not force_pallas and B < min_pallas_batch:
        # Tiny batch: launch + DMA overhead dominates; let XLA fuse it.
        h = jnp.maximum(
            jnp.dot(pooled_output.astype(mm_dtype), params["w1"],
                    preferred_element_type=jnp.float32) + params["b1"], 0.0)
        logits = (jnp.dot(h.astype(mm_dtype), params["w2"],
                          preferred_element_type=jnp.float32)
                  + params["b2"]).astype(out_dtype)
        return (logits[:, :out_dim],)

    mm_bytes = jnp.dtype(mm_dtype).itemsize
    out_bytes = jnp.dtype(out_dtype).itemsize
    cap = _vmem_cap_bytes()

    x = pooled_output.astype(mm_dtype)
    tb = _pick_batch_tile(B, batch_tile, mm_bytes)
    th = _pick_hid_chunk(hid_dim, in_dim, out_pad, mm_bytes, cap, hid_chunk)
    assert hid_dim % th == 0, "hid_chunk must divide hid_dim"
    chunked = th != hid_dim
    wfac = 2 if chunked else _CONST_BUF_FACTOR

    def vmem_needed(tb_):
        return (2 * tb_ * in_dim * mm_bytes               # x tile (double-buffered)
                + 2 * tb_ * out_pad * out_bytes           # output tile
                + tb_ * out_pad * 4                       # f32 logits accumulator
                + tb_ * th * (4 + mm_bytes)               # h (f32) + narrow copy of h
                + wfac * (in_dim * th + th * out_pad) * mm_bytes   # W1/W2 (chunk)
                + wfac * (th + out_pad) * 4)              # biases

    align = _row_align(mm_bytes)
    needed = vmem_needed(tb)
    while needed > cap and tb > align:                    # shrink tile to fit VMEM
        tb = max(align, _round_up(tb // 2, align))
        needed = vmem_needed(tb)
    vmem_limit = int(min(cap, max(32 << 20, int(needed * 1.25))))

    grid = (pl.cdiv(B, tb), hid_dim // th)

    if chunked:
        w1_spec = pl.BlockSpec((in_dim, th), lambda i, k: (0, k))
        b1_spec = pl.BlockSpec((1, th), lambda i, k: (0, k))
        w2_spec = pl.BlockSpec((th, out_pad), lambda i, k: (k, 0))
    else:
        w1_spec = _const_spec((in_dim, th))
        b1_spec = _const_spec((1, th))
        w2_spec = _const_spec((th, out_pad))
    b2_spec = _const_spec((1, out_pad))

    cost = pl.CostEstimate(
        flops=int(2 * B * (in_dim * hid_dim + hid_dim * out_pad)),
        transcendentals=0,
        bytes_accessed=int(B * in_dim * mm_bytes
                           + (in_dim * hid_dim + hid_dim * out_pad) * mm_bytes
                           + (hid_dim + out_pad) * 4
                           + B * out_pad * out_bytes))

    padded = pl.pallas_call(
        _head_kernel,
        out_shape=jax.ShapeDtypeStruct((B, out_pad), out_dtype),
        grid_spec=pltpu.PrefetchScalarGridSpec(
            num_scalar_prefetch=0,
            grid=grid,
            in_specs=[
                pl.BlockSpec((tb, in_dim), lambda i, k: (i, 0)),   # x tile
                w1_spec,                                           # W1 (chunk)
                b1_spec,                                           # b1 (chunk)
                w2_spec,                                           # W2 (chunk, padded)
                b2_spec,                                           # b2 (padded)
            ],
            out_specs=pl.BlockSpec((tb, out_pad), lambda i, k: (i, 0)),
            scratch_shapes=[pltpu.VMEM((tb, out_pad), jnp.float32)],
        ),
        compiler_params=pltpu.CompilerParams(
            # TODO(synk): on v7x (2 TCs/chip) use pltpu.CORE_PARALLEL on the
            # batch axis to shard batch tiles across both TensorCores.
            dimension_semantics=("parallel", "arbitrary"),
            vmem_limit_bytes=vmem_limit),
        cost_estimate=cost,
    )(x, params["w1"], params["b1"], params["w2"], params["b2"])

    logits = padded[:, :out_dim] if out_pad != out_dim else padded
    return (logits,)


def sequence_classification_head(pooled_output, w1, b1, w2, b2, *,
                                 matmul_dtype=jnp.bfloat16,
                                 batch_tile=512,
                                 hid_chunk=None,
                                 min_pallas_batch=256,
                                 force_pallas=False):
    """One-shot convenience wrapper.  For repeated calls, hoist
    prepare_head_params() out of the hot loop and call the *_prepared version."""
    params = prepare_head_params(w1, b1, w2, b2, matmul_dtype=matmul_dtype)
    return sequence_classification_head_prepared(
        pooled_output, params, batch_tile=batch_tile, hid_chunk=hid_chunk,
        min_pallas_batch=min_pallas_batch, force_pallas=force_pallas)


def _reference(pooled_output, w1, b1, w2, b2):
    h = jnp.maximum(pooled_output @ w1 + b1, 0.0)
    return h @ w2 + b2


if __name__ == "__main__":
    # Module config: num_layer=1, dropout=0.0; small MXU/lane-friendly dims.
    B, in_dim, hid_dim, out_dim = 64, 128, 128, 8

    key = jax.random.PRNGKey(0)
    kx, kw1, kb1, kw2, kb2 = jax.random.split(key, 5)

    x = jax.random.normal(kx, (B, in_dim), dtype=jnp.float32)
    lim1 = 1.0 / (in_dim ** 0.5)
    w1 = jax.random.uniform(kw1, (in_dim, hid_dim), jnp.float32, -lim1, lim1)
    b1 = jax.random.uniform(kb1, (hid_dim,), jnp.float32, -lim1, lim1)
    lim2 = 1.0 / (hid_dim ** 0.5)
    w2 = jax.random.uniform(kw2, (hid_dim, out_dim), jnp.float32, -lim2, lim2)
    b2 = jax.random.uniform(kb2, (out_dim,), jnp.float32, -lim2, lim2)

    ref = _reference(x, w1, b1, w2, b2)

    # 1) Default path: bf16 MXU operands, f32 accumulation (forced Pallas).
    (logits_bf16,) = sequence_classification_head(x, w1, b1, w2, b2,
                                                  force_pallas=True)
    logits_bf16 = jax.block_until_ready(logits_bf16)
    assert logits_bf16.shape == (B, out_dim)
    assert jnp.allclose(logits_bf16, ref, atol=1e-1, rtol=1e-1), "bf16 mismatch"

    # 2) Full-f32 MXU operands: tight tolerance.
    (logits_f32,) = sequence_classification_head(
        x, w1, b1, w2, b2, matmul_dtype=jnp.float32, force_pallas=True)
    logits_f32 = jax.block_until_ready(logits_f32)
    assert jnp.allclose(logits_f32, ref, atol=1e-5, rtol=1e-5), "f32 mismatch"

    # 3) Hid-chunked streaming path (forced th=128 over hid_dim=512):
    #    exercises the accumulator init/finalize used for v7x-sized heads.
    hid2 = 512
    kw1b, kb1b, kw2b = jax.random.split(kb2, 3)
    w1b = jax.random.uniform(kw1b, (in_dim, hid2), jnp.float32, -lim1, lim1)
    b1b = jax.random.uniform(kb1b, (hid2,), jnp.float32, -lim1, lim1)
    lim2b = 1.0 / (hid2 ** 0.5)
    w2b = jax.random.uniform(kw2b, (hid2, out_dim), jnp.float32, -lim2b, lim2b)
    refb = _reference(x, w1b, b1b, w2b, b2)
    (logits_chunk,) = sequence_classification_head(
        x, w1b, b1b, w2b, b2, matmul_dtype=jnp.float32,
        hid_chunk=128, force_pallas=True)
    logits_chunk = jax.block_until_ready(logits_chunk)
    assert jnp.allclose(logits_chunk, refb, atol=1e-4, rtol=1e-4), "chunked mismatch"

    # 4) Tiny-batch auto-dispatch: plain jnp fallback (no Pallas launch).
    (logits_small,) = sequence_classification_head(
        x[:4], w1, b1, w2, b2, matmul_dtype=jnp.float32)
    logits_small = jax.block_until_ready(logits_small)
    assert jnp.allclose(logits_small, ref[:4], atol=1e-5, rtol=1e-5), "fallback mismatch"

    print("KERNEL_OK")
</pallas_src>

<mosaic_0001>
module attributes {stable_mosaic.version = 11 : i64} {
  func.func @_head_kernel(%arg0: i32, %arg1: i32, %arg2: memref<64x128xbf16, #tpu.memory_space<vmem>>, %arg3: memref<128x128xbf16, #tpu.memory_space<vmem>>, %arg4: memref<1x128xf32, #tpu.memory_space<vmem>>, %arg5: memref<128x128xbf16, #tpu.memory_space<vmem>>, %arg6: memref<1x128xf32, #tpu.memory_space<vmem>>, %arg7: memref<64x128xf32, #tpu.memory_space<vmem>>, %arg8: memref<64x128xf32, #tpu.memory_space<vmem>>) attributes {dimension_semantics = [#tpu.dimension_semantics<parallel>, #tpu.dimension_semantics<arbitrary>], iteration_bounds = array<i64: 1, 1>, scalar_prefetch = 0 : i64, scratch_operands = 1 : i64, tpu.core_type = #tpu.core_type<tc>, window_params = [{transform_indices = @transform_0, window_bounds = array<i64: 64, 128>}, {pipeline_mode = #tpu.pipeline_mode<synchronous>, transform_indices = @transform_1, window_bounds = array<i64: 128, 128>}, {pipeline_mode = #tpu.pipeline_mode<synchronous>, transform_indices = @transform_2, window_bounds = array<i64: 1, 128>}, {pipeline_mode = #tpu.pipeline_mode<synchronous>, transform_indices = @transform_3, window_bounds = array<i64: 128, 128>}, {pipeline_mode = #tpu.pipeline_mode<synchronous>, transform_indices = @transform_4, window_bounds = array<i64: 1, 128>}, {transform_indices = @transform_5, window_bounds = array<i64: 64, 128>}]} {
    %c0_i32 = arith.constant 0 : i32
    %0 = arith.cmpi eq, %arg1, %c0_i32 : i32
    %1 = arith.extui %0 : i1 to i32
    %c0_i32_0 = arith.constant 0 : i32
    %2 = arith.cmpi ne, %1, %c0_i32_0 : i32
    scf.if %2 {
      %cst_16 = arith.constant 0.000000e+00 : f32
      %20 = vector.broadcast %cst_16 : f32 to vector<64x128xf32>
      %c0_17 = arith.constant 0 : index
      %c0_18 = arith.constant 0 : index
      %21 = vector.load %arg8[%c0_17, %c0_18] : memref<64x128xf32, #tpu.memory_space<vmem>>, vector<64x128xf32>
      tpu.vector_store %arg8[%c0_17, %c0_18], %20 {strides = array<i32>} : memref<64x128xf32, #tpu.memory_space<vmem>>, vector<64x128xf32>,
    } else {
    }
    %c0 = arith.constant 0 : index
    %c0_1 = arith.constant 0 : index
    %3 = vector.load %arg2[%c0, %c0_1] : memref<64x128xbf16, #tpu.memory_space<vmem>>, vector<64x128xbf16>
    %c0_2 = arith.constant 0 : index
    %c0_3 = arith.constant 0 : index
    %4 = vector.load %arg3[%c0_2, %c0_3] : memref<128x128xbf16, #tpu.memory_space<vmem>>, vector<128x128xbf16>
    %cst = arith.constant dense<0.000000e+00> : vector<64x128xf32>
    %5 = tpu.matmul %3, %4, %cst {dimension_numbers = #tpu.dot_dimension_numbers<[1], [0], [0], [1], [0, 0, 1, 1], [], []>} : vector<64x128xbf16>, vector<128x128xbf16>, vector<64x128xf32> -> vector<64x128xf32>
    %c0_4 = arith.constant 0 : index
    %c0_5 = arith.constant 0 : index
    %6 = vector.load %arg4[%c0_4, %c0_5] : memref<1x128xf32, #tpu.memory_space<vmem>>, vector<1x128xf32>
    %7 = vector.broadcast %6 : vector<1x128xf32> to vector<64x128xf32>
    %8 = arith.addf %5, %7 : vector<64x128xf32>
    %cst_6 = arith.constant 0.000000e+00 : f32
    %9 = vector.broadcast %cst_6 : f32 to vector<64x128xf32>
    %10 = arith.maximumf %8, %9 : vector<64x128xf32>
    %c0_7 = arith.constant 0 : index
    %c0_8 = arith.constant 0 : index
    %11 = vector.load %arg8[%c0_7, %c0_8] : memref<64x128xf32, #tpu.memory_space<vmem>>, vector<64x128xf32>
    %12 = arith.truncf %10 : vector<64x128xf32> to vector<64x128xbf16>
    %c0_9 = arith.constant 0 : index
    %c0_10 = arith.constant 0 : index
    %13 = vector.load %arg5[%c0_9, %c0_10] : memref<128x128xbf16, #tpu.memory_space<vmem>>, vector<128x128xbf16>
    %cst_11 = arith.constant dense<0.000000e+00> : vector<64x128xf32>
    %14 = tpu.matmul %12, %13, %cst_11 {dimension_numbers = #tpu.dot_dimension_numbers<[1], [0], [0], [1], [0, 0, 1, 1], [], []>} : vector<64x128xbf16>, vector<128x128xbf16>, vector<64x128xf32> -> vector<64x128xf32>
    %15 = arith.addf %11, %14 : vector<64x128xf32>
    %c0_12 = arith.constant 0 : index
    %c0_13 = arith.constant 0 : index
    %16 = vector.load %arg8[%c0_12, %c0_13] : memref<64x128xf32, #tpu.memory_space<vmem>>, vector<64x128xf32>
    tpu.vector_store %arg8[%c0_12, %c0_13], %15 {strides = array<i32>} : memref<64x128xf32, #tpu.memory_space<vmem>>, vector<64x128xf32>,
    %c0_i32_14 = arith.constant 0 : i32
    %17 = arith.cmpi eq, %arg1, %c0_i32_14 : i32
    %18 = arith.extui %17 : i1 to i32
    %c0_i32_15 = arith.constant 0 : i32
    %19 = arith.cmpi ne, %18, %c0_i32_15 : i32
    scf.if %19 {
      %c0_16 = arith.constant 0 : index
      %c0_17 = arith.constant 0 : index
      %20 = vector.load %arg8[%c0_16, %c0_17] : memref<64x128xf32, #tpu.memory_space<vmem>>, vector<64x128xf32>
      %c0_18 = arith.constant 0 : index
      %c0_19 = arith.constant 0 : index
      %21 = vector.load %arg6[%c0_18, %c0_19] : memref<1x128xf32, #tpu.memory_space<vmem>>, vector<1x128xf32>
      %22 = vector.broadcast %21 : vector<1x128xf32> to vector<64x128xf32>
      %23 = arith.addf %20, %22 : vector<64x128xf32>
      %c0_20 = arith.constant 0 : index
      %c0_21 = arith.constant 0 : index
      %24 = vector.load %arg7[%c0_20, %c0_21] : memref<64x128xf32, #tpu.memory_space<vmem>>, vector<64x128xf32>
      tpu.vector_store %arg7[%c0_20, %c0_21], %23 {strides = array<i32>} : memref<64x128xf32, #tpu.memory_space<vmem>>, vector<64x128xf32>,
    } else {
    }
    return
  }
  func.func @transform_0(%arg0: i32, %arg1: i32) -> (i32, i32) {
    %c0_i32 = arith.constant 0 : i32
    %c0_i32_0 = arith.constant 0 : i32
    return %arg0, %c0_i32 : i32, i32
  }
  func.func @transform_1(%arg0: i32, %arg1: i32) -> (i32, i32) {
    %c0_i32 = arith.constant 0 : i32
    %c0_i32_0 = arith.constant 0 : i32
    %c0_i32_1 = arith.constant 0 : i32
    return %c0_i32, %c0_i32_0 : i32, i32
  }
  func.func @transform_2(%arg0: i32, %arg1: i32) -> (i32, i32) {
    %c0_i32 = arith.constant 0 : i32
    %c0_i32_0 = arith.constant 0 : i32
    %c0_i32_1 = arith.constant 0 : i32
    return %c0_i32, %c0_i32_0 : i32, i32
  }
  func.func @transform_3(%arg0: i32, %arg1: i32) -> (i32, i32) {
    %c0_i32 = arith.constant 0 : i32
    %c0_i32_0 = arith.constant 0 : i32
    %c0_i32_1 = arith.constant 0 : i32
    return %c0_i32, %c0_i32_0 : i32, i32
  }
  func.func @transform_4(%arg0: i32, %arg1: i32) -> (i32, i32) {
    %c0_i32 = arith.constant 0 : i32
    %c0_i32_0 = arith.constant 0 : i32
    %c0_i32_1 = arith.constant 0 : i32
    return %c0_i32, %c0_i32_0 : i32, i32
  }
  func.func @transform_5(%arg0: i32, %arg1: i32) -> (i32, i32) {
    %c0_i32 = arith.constant 0 : i32
    %c0_i32_0 = arith.constant 0 : i32
    return %arg0, %c0_i32 : i32, i32
  }
}

</mosaic_0001>

<llo_original>
// kernel: tpu_custom_call.1
$region0: #{tpu_custom_call.1}
  #allocation0 [shape = 'u32[]', space=smem, size = 0x4, offset = 0x4, fixed_abs, tag = 'smem constant byte address 0x4 - core index']
  #allocation1 [shape = 'u32[144,128]{1,0:T(1,128)}', space=vmem, size = 0x12000, scoped, tag = 'internal scratch']
  #allocation2 [shape = 'f32[64,128]{1,0:T(8,128)}', space=vmem, size = 0x8000, scoped, tag = 'scratch operand']
  %s0 = inlined_call_operand.hbm [shape: bf16[64,128], index: 0, kind: input, shape index: {}]
  %s1 = inlined_call_operand.hbm [shape: bf16[128,128], index: 1, kind: input, shape index: {}]
  %s2 = inlined_call_operand.vmem [shape: f32[1,128], index: 2, kind: input, shape index: {}]
  %s3 = inlined_call_operand.hbm [shape: bf16[128,128], index: 3, kind: input, shape index: {}]
  %s4 = inlined_call_operand.vmem [shape: f32[1,128], index: 4, kind: input, shape index: {}]
  %s5 = inlined_call_operand.hbm [shape: f32[64,128], index: 5, kind: output, shape index: {}]
  %s6 = sld [smem:[#allocation0]]
  $region50: #{tpu_custom_call.1} parent=0
    _
  %s8 = ssub.s32 1, %s6
  %s9 = scalar_select 0, %s8, %s6
  $region1: #{tpu_custom_call.1} parent=0
    #allocation3 [shape = 'u8[16384]{0}', space=vmem, size = 0x4000, scoped, tag = 'input window, operand 0, single buffered']
    #allocation4 [shape = 's32[1]{0}', space=sflag, size = 0x4, scoped, tag = 'scoped memory for tpu_custom_call.1']
    #allocation5 [shape = 's32[1]{0}', space=sflag, size = 0x4, scoped, tag = 'scoped memory for tpu_custom_call.1']
    #allocation6 [shape = 'u8[32768]{0}', space=vmem, size = 0x8000, scoped, tag = 'input window, operand 1, single buffered']
    #allocation7 [shape = 's32[1]{0}', space=sflag, size = 0x4, scoped, tag = 'scoped memory for tpu_custom_call.1']
    #allocation8 [shape = 'u8[32768]{0}', space=vmem, size = 0x8000, scoped, tag = 'input window, operand 3, single buffered']
    #allocation9 [shape = 'u8[32768]{0}', space=vmem, size = 0x8000, scoped, tag = 'output window, operand 0, single buffered']
    %10 = vsyncpa [#allocation4], 0
    %11 = vsyncpa [#allocation7], 0
    %12 = vsyncpa [#allocation5], 0
    // Predicated region
    $region2: #{tpu_custom_call.1} parent=1 // pred_check
      _
    $region3: #{tpu_custom_call.1} parent=1 // pred_check_branch
      %14 = sbr.rel (0) target = $region5
    $region4: #{tpu_custom_call.1} parent=1 // pred_region
      %s16 = ssub.s32 512, 512
      %17 = vsyncadd [#allocation4], %s16
      %s18 = sshll.u32 [#allocation3], 4
      %s19 = int_to_ptr.vmem [resolvable:$true] %s18
      %24 = dma.hbm_to_vmem [thread:$0]  %s0, 512, %s19, [#allocation4], 64, 64, 4
    $region5: #{tpu_custom_call.1} parent=1 // pred_fallthru
      _
    // Predicated region
    $region6: #{tpu_custom_call.1} parent=1 // pred_check
      _
    $region7: #{tpu_custom_call.1} parent=1 // pred_check_branch
      %26 = sbr.rel (0) target = $region9
    $region8: #{tpu_custom_call.1} parent=1 // pred_region
      %s28 = ssub.s32 1024, 1024
      %29 = vsyncadd [#allocation7], %s28
      %s30 = sshll.u32 [#allocation6], 4
      %s31 = int_to_ptr.vmem [resolvable:$true] %s30
      %36 = dma.hbm_to_vmem [thread:$0]  %s1, 1024, %s31, [#allocation7], 64, 64, 4
    $region9: #{tpu_custom_call.1} parent=1 // pred_fallthru
      _
    // Predicated region
    $region10: #{tpu_custom_call.1} parent=1 // pred_check
      _
    $region11: #{tpu_custom_call.1} parent=1 // pred_check_branch
      %38 = sbr.rel (0) target = $region13
    $region12: #{tpu_custom_call.1} parent=1 // pred_region
      _
    $region13: #{tpu_custom_call.1} parent=1 // pred_fallthru
      _
    // Predicated region
    $region14: #{tpu_custom_call.1} parent=1 // pred_check
      _
    $region15: #{tpu_custom_call.1} parent=1 // pred_check_branch
      %40 = sbr.rel (0) target = $region17
    $region16: #{tpu_custom_call.1} parent=1 // pred_region
      %s42 = ssub.s32 1024, 1024
      %43 = vsyncadd [#allocation7], %s42
      %s44 = sshll.u32 [#allocation8], 4
      %s45 = int_to_ptr.vmem [resolvable:$true] %s44
      %50 = dma.hbm_to_vmem [thread:$0]  %s3, 1024, %s45, [#allocation7], 64, 64, 4
    $region17: #{tpu_custom_call.1} parent=1 // pred_fallthru
      _
    // Predicated region
    $region18: #{tpu_custom_call.1} parent=1 // pred_check
      _
    $region19: #{tpu_custom_call.1} parent=1 // pred_check_branch
      %52 = sbr.rel (0) target = $region21
    $region20: #{tpu_custom_call.1} parent=1 // pred_region
      _
    $region21: #{tpu_custom_call.1} parent=1 // pred_fallthru
      _
    // Predicated region
    $region22: #{tpu_custom_call.1} parent=1 // pred_check
      _
    $region23: #{tpu_custom_call.1} parent=1 // pred_check_branch
      %54 = sbr.rel (0) target = $region25
    $region24: #{tpu_custom_call.1} parent=1 // pred_region
      %55 = dma.done [#allocation4], 512
    $region25: #{tpu_custom_call.1} parent=1 // pred_fallthru
      _
    // Predicated region
    $region26: #{tpu_custom_call.1} parent=1 // pred_check
      _
    $region27: #{tpu_custom_call.1} parent=1 // pred_check_branch
      %57 = sbr.rel (0) target = $region29
    $region28: #{tpu_custom_call.1} parent=1 // pred_region
      %58 = dma.done [#allocation7], 1024
    $region29: #{tpu_custom_call.1} parent=1 // pred_fallthru
      _
    // Predicated region
    $region30: #{tpu_custom_call.1} parent=1 // pred_check
      _
    $region31: #{tpu_custom_call.1} parent=1 // pred_check_branch
      %60 = sbr.rel (0) target = $region33
    $region32: #{tpu_custom_call.1} parent=1 // pred_region
      %61 = dma.done [#allocation7], 1024
    $region33: #{tpu_custom_call.1} parent=1 // pred_fallthru
      _
    %p63 = scmp.eq.s32.totalorder 0, 0
    // Predicated region
    $region34: #{tpu_custom_call.1} parent=1 // pred_check
      %p64 = pneg %p63
    $region35: #{tpu_custom_call.1} parent=1 // pred_check_branch
      %66 = sbr.rel (%p64) target = $region37
    $region36: #{tpu_custom_call.1} parent=1 // pred_region
      %67 = vst [vmem:[#allocation2] sm:$0xff] 0.0
      %68 = vst [vmem:[#allocation2 + $0x8] sm:$0xff] 0.0
      %69 = vst [vmem:[#allocation2 + $0x10] sm:$0xff] 0.0
      %70 = vst [vmem:[#allocation2 + $0x18] sm:$0xff] 0.0
      %71 = vst [vmem:[#allocation2 + $0x20] sm:$0xff] 0.0
      %72 = vst [vmem:[#allocation2 + $0x28] sm:$0xff] 0.0
      %73 = vst [vmem:[#allocation2 + $0x30] sm:$0xff] 0.0
      %74 = vst [vmem:[#allocation2 + $0x38] sm:$0xff] 0.0
    $region37: #{tpu_custom_call.1} parent=1 // pred_fallthru
      _
    %v75 = vld [vmem:[#allocation3] sm:$0xf]
    %v76 = vld [vmem:[#allocation3 + $0x4] sm:$0xf]
    %v77 = vld [vmem:[#allocation3 + $0x8] sm:$0xf]
    %v78 = vld [vmem:[#allocation3 + $0xc] sm:$0xf]
    %v79 = vld [vmem:[#allocation3 + $0x10] sm:$0xf]
    %v80 = vld [vmem:[#allocation3 + $0x14] sm:$0xf]
    %v81 = vld [vmem:[#allocation3 + $0x18] sm:$0xf]
    %v82 = vld [vmem:[#allocation3 + $0x1c] sm:$0xf]
    %v83 = vld [vmem:[#allocation6] sm:$0xf]
    %v84 = vld [vmem:[#allocation6 + $0x4] sm:$0xf]
    %v85 = vld [vmem:[#allocation6 + $0x8] sm:$0xf]
    %v86 = vld [vmem:[#allocation6 + $0xc] sm:$0xf]
    %v87 = vld [vmem:[#allocation6 + $0x10] sm:$0xf]
    %v88 = vld [vmem:[#allocation6 + $0x14] sm:$0xf]
    %v89 = vld [vmem:[#allocation6 + $0x18] sm:$0xf]
    %v90 = vld [vmem:[#allocation6 + $0x1c] sm:$0xf]
    %v91 = vld [vmem:[#allocation6 + $0x20] sm:$0xf]
    %v92 = vld [vmem:[#allocation6 + $0x24] sm:$0xf]
    %v93 = vld [vmem:[#allocation6 + $0x28] sm:$0xf]
    %v94 = vld [vmem:[#allocation6 + $0x2c] sm:$0xf]
    %v95 = vld [vmem:[#allocation6 + $0x30] sm:$0xf]
    %v96 = vld [vmem:[#allocation6 + $0x34] sm:$0xf]
    %v97 = vld [vmem:[#allocation6 + $0x38] sm:$0xf]
    %v98 = vld [vmem:[#allocation6 + $0x3c] sm:$0xf]
    %v99 = vld [vmem:[%s2] sm:$0x1]
    %v101 = vlaneseq
    %v102 = vshrl.u32 %v101, 7
    %v103 = vsub.s32 0, %v102
    %v104 = vrot.slane %v99, %v103
    %v114 = vunpack.c.l.b16 %v75
    %v115 = vunpack.c.l.b16 %v76
    %v116 = vunpack.c.l.b16 %v77
    %v117 = vunpack.c.l.b16 %v78
    %v118 = vunpack.c.l.b16 %v79
    %v119 = vunpack.c.l.b16 %v80
    %v120 = vunpack.c.l.b16 %v81
    %v121 = vunpack.c.l.b16 %v82
    %v122 = vpack.c.b16 %v115, %v114
    %v123 = vpack.c.b16 %v117, %v116
    %v124 = vpack.c.b16 %v119, %v118
    %v125 = vpack.c.b16 %v121, %v120
    %v146 = vunpack.c.l.b16 %v83
    %v147 = vunpack.c.l.b16 %v84
    %v148 = vunpack.c.l.b16 %v85
    %v149 = vunpack.c.l.b16 %v86
    %v150 = vunpack.c.l.b16 %v87
    %v151 = vunpack.c.l.b16 %v88
    %v152 = vunpack.c.l.b16 %v89
    %v153 = vunpack.c.l.b16 %v90
    %v154 = vunpack.c.l.b16 %v91
    %v155 = vunpack.c.l.b16 %v92
    %v156 = vunpack.c.l.b16 %v93
    %v157 = vunpack.c.l.b16 %v94
    %v158 = vunpack.c.l.b16 %v95
    %v159 = vunpack.c.l.b16 %v96
    %v160 = vunpack.c.l.b16 %v97
    %v161 = vunpack.c.l.b16 %v98
    %v162 = vpack.c.b16 %v147, %v146
    %v163 = vpack.c.b16 %v149, %v148
    %v164 = vpack.c.b16 %v151, %v150
    %v165 = vpack.c.b16 %v153, %v152
    %v166 = vpack.c.b16 %v155, %v154
    %v167 = vpack.c.b16 %v157, %v156
    %v168 = vpack.c.b16 %v159, %v158
    %v169 = vpack.c.b16 %v161, %v160
    %178 = vmatprep.subr.bf16.mxu0 0
    %179 = vmatpush1.bf16.msra.mxu0 %v162
    %180 = vmatprep.subr.bf16.mxu0 0
    %181 = vmatpush1.bf16.msra.mxu0 %v163
    %182 = vmatprep.subr.bf16.mxu0 0
    %183 = vmatpush1.bf16.msra.mxu0 %v164
    %184 = vmatprep.subr.bf16.mxu0 0
    %185 = vmatpush1.bf16.msra.mxu0 %v165
    %186 = vmatprep.subr.bf16.mxu0 0
    %187 = vmatpush1.bf16.msra.mxu0 %v166
    %188 = vmatprep.subr.bf16.mxu0 0
    %189 = vmatpush1.bf16.msra.mxu0 %v167
    %190 = vmatprep.subr.bf16.mxu0 0
    %191 = vmatpush1.bf16.msra.mxu0 %v168
    %192 = vmatprep.subr.bf16.mxu0 0
    %193 = vmatpush1.bf16.msra.mxu0 %v169
    %194 = vmatprep.subr.bf16.mxu0 0
    %195 = vmatpush1.bf16.msra.mxu0 0
    %196 = vmatprep.subr.bf16.mxu0 0
    %197 = vmatpush1.bf16.msra.mxu0 0
    %198 = vmatprep.subr.bf16.mxu0 0
    %199 = vmatpush1.bf16.msra.mxu0 0
    %200 = vmatprep.subr.bf16.mxu0 0
    %201 = vmatpush1.bf16.msra.mxu0 0
    %202 = vmatprep.subr.bf16.mxu0 0
    %203 = vmatpush1.bf16.msra.mxu0 0
    %204 = vmatprep.subr.bf16.mxu0 0
    %205 = vmatpush1.bf16.msra.mxu0 0
    %206 = vmatprep.subr.bf16.mxu0 0
    %207 = vmatpush1.bf16.msra.mxu0 0
    %208 = vmatprep.subr.bf16.mxu0 0
    %209 = vmatpush1.bf16.msra.mxu0 0
    %210 = vmatprep.mubr.bf16.mxu0 0
    %211 = vmatmul.mubr.bf16.gmra.mrb[0].mxu0 %v122
    %v212 = vpop.f32.mrb[0].mxu0
    %v213 = vadd.f32 %v104, %v212
    %v214 = vpop.f32.mrb[0].mxu0
    %v215 = vpop.f32.mrb[0].mxu0
    %v216 = vadd.f32 %v104, %v215
    %v217 = vpop.f32.mrb[0].mxu0
    %218 = vmatprep.mubr.bf16.mxu0 0
    %219 = vmatmul.mubr.bf16.gmra.mrb[0].mxu0 %v123
    %v220 = vpop.f32.mrb[0].mxu0
    %v221 = vadd.f32 %v104, %v220
    %v222 = vpop.f32.mrb[0].mxu0
    %v223 = vpop.f32.mrb[0].mxu0
    %v224 = vadd.f32 %v104, %v223
    %v225 = vpop.f32.mrb[0].mxu0
    %226 = vmatprep.mubr.bf16.mxu0 0
    %227 = vmatmul.mubr.bf16.gmra.mrb[0].mxu0 %v124
    %v228 = vpop.f32.mrb[0].mxu0
    %v229 = vadd.f32 %v104, %v228
    %v230 = vpop.f32.mrb[0].mxu0
    %v231 = vpop.f32.mrb[0].mxu0
    %v232 = vadd.f32 %v104, %v231
    %v233 = vpop.f32.mrb[0].mxu0
    %234 = vmatprep.mubr.bf16.mxu0 0
    %235 = vmatmul.mubr.bf16.gmra.mrb[0].mxu0 %v125
    %v236 = vpop.f32.mrb[0].mxu0
    %v237 = vadd.f32 %v104, %v236
    %v238 = vpop.f32.mrb[0].mxu0
    %v239 = vpop.f32.mrb[0].mxu0
    %v240 = vadd.f32 %v104, %v239
    %v241 = vpop.f32.mrb[0].mxu0
    %242 = vdwg.mxu0
    %v243 = vmax.f32 %v213, 0.0
    %v244 = vmax.f32 %v216, 0.0
    %v245 = vmax.f32 %v221, 0.0
    %v246 = vmax.f32 %v224, 0.0
    %v247 = vmax.f32 %v229, 0.0
    %v248 = vmax.f32 %v232, 0.0
    %v249 = vmax.f32 %v237, 0.0
    %v250 = vmax.f32 %v240, 0.0
    %v251 = vld [vmem:[#allocation2] sm:$0xff]
    %v252 = vld [vmem:[#allocation2 + $0x8] sm:$0xff]
    %v253 = vld [vmem:[#allocation2 + $0x10] sm:$0xff]
    %v254 = vld [vmem:[#allocation2 + $0x18] sm:$0xff]
    %v255 = vld [vmem:[#allocation2 + $0x20] sm:$0xff]
    %v256 = vld [vmem:[#allocation2 + $0x28] sm:$0xff]
    %v257 = vld [vmem:[#allocation2 + $0x30] sm:$0xff]
    %v258 = vld [vmem:[#allocation2 + $0x38] sm:$0xff]
    %v259 = vpack.c.bf16 %v244, %v243
    %v260 = vpack.c.bf16 %v246, %v245
    %v261 = vpack.c.bf16 %v248, %v247
    %v262 = vpack.c.bf16 %v250, %v249
    %v263 = vld [vmem:[#allocation8] sm:$0xf]
    %v264 = vld [vmem:[#allocation8 + $0x4] sm:$0xf]
    %v265 = vld [vmem:[#allocation8 + $0x8] sm:$0xf]
    %v266 = vld [vmem:[#allocation8 + $0xc] sm:$0xf]
    %v267 = vld [vmem:[#allocation8 + $0x10] sm:$0xf]
    %v268 = vld [vmem:[#allocation8 + $0x14] sm:$0xf]
    %v269 = vld [vmem:[#allocation8 + $0x18] sm:$0xf]
    %v270 = vld [vmem:[#allocation8 + $0x1c] sm:$0xf]
    %v271 = vld [vmem:[#allocation8 + $0x20] sm:$0xf]
    %v272 = vld [vmem:[#allocation8 + $0x24] sm:$0xf]
    %v273 = vld [vmem:[#allocation8 + $0x28] sm:$0xf]
    %v274 = vld [vmem:[#allocation8 + $0x2c] sm:$0xf]
    %v275 = vld [vmem:[#allocation8 + $0x30] sm:$0xf]
    %v276 = vld [vmem:[#allocation8 + $0x34] sm:$0xf]
    %v277 = vld [vmem:[#allocation8 + $0x38] sm:$0xf]
    %v278 = vld [vmem:[#allocation8 + $0x3c] sm:$0xf]
    %v295 = vunpack.c.l.b16 %v263
    %v296 = vunpack.c.l.b16 %v264
    %v297 = vunpack.c.l.b16 %v265
    %v298 = vunpack.c.l.b16 %v266
    %v299 = vunpack.c.l.b16 %v267
    %v300 = vunpack.c.l.b16 %v268
    %v301 = vunpack.c.l.b16 %v269
    %v302 = vunpack.c.l.b16 %v270
    %v303 = vunpack.c.l.b16 %v271
    %v304 = vunpack.c.l.b16 %v272
    %v305 = vunpack.c.l.b16 %v273
    %v306 = vunpack.c.l.b16 %v274
    %v307 = vunpack.c.l.b16 %v275
    %v308 = vunpack.c.l.b16 %v276
    %v309 = vunpack.c.l.b16 %v277
    %v310 = vunpack.c.l.b16 %v278
    %v311 = vpack.c.b16 %v296, %v295
    %v312 = vpack.c.b16 %v298, %v297
    %v313 = vpack.c.b16 %v300, %v299
    %v314 = vpack.c.b16 %v302, %v301
    %v315 = vpack.c.b16 %v304, %v303
    %v316 = vpack.c.b16 %v306, %v305
    %v317 = vpack.c.b16 %v308, %v307
    %v318 = vpack.c.b16 %v310, %v309
    %327 = vmatprep.subr.bf16.mxu0 0
    %328 = vmatpush1.bf16.msra.mxu0 %v311
    %329 = vmatprep.subr.bf16.mxu0 0
    %330 = vmatpush1.bf16.msra.mxu0 %v312
    %331 = vmatprep.subr.bf16.mxu0 0
    %332 = vmatpush1.bf16.msra.mxu0 %v313
    %333 = vmatprep.subr.bf16.mxu0 0
    %334 = vmatpush1.bf16.msra.mxu0 %v314
    %335 = vmatprep.subr.bf16.mxu0 0
    %336 = vmatpush1.bf16.msra.mxu0 %v315
    %337 = vmatprep.subr.bf16.mxu0 0
    %338 = vmatpush1.bf16.msra.mxu0 %v316
    %339 = vmatprep.subr.bf16.mxu0 0
    %340 = vmatpush1.bf16.msra.mxu0 %v317
    %341 = vmatprep.subr.bf16.mxu0 0
    %342 = vmatpush1.bf16.msra.mxu0 %v318
    %343 = vmatprep.subr.bf16.mxu0 0
    %344 = vmatpush1.bf16.msra.mxu0 0
    %345 = vmatprep.subr.bf16.mxu0 0
    %346 = vmatpush1.bf16.msra.mxu0 0
    %347 = vmatprep.subr.bf16.mxu0 0
    %348 = vmatpush1.bf16.msra.mxu0 0
    %349 = vmatprep.subr.bf16.mxu0 0
    %350 = vmatpush1.bf16.msra.mxu0 0
    %351 = vmatprep.subr.bf16.mxu0 0
    %352 = vmatpush1.bf16.msra.mxu0 0
    %353 = vmatprep.subr.bf16.mxu0 0
    %354 = vmatpush1.bf16.msra.mxu0 0
    %355 = vmatprep.subr.bf16.mxu0 0
    %356 = vmatpush1.bf16.msra.mxu0 0
    %357 = vmatprep.subr.bf16.mxu0 0
    %358 = vmatpush1.bf16.msra.mxu0 0
    %359 = vmatprep.mubr.bf16.mxu0 0
    %360 = vmatmul.mubr.bf16.gmra.mrb[0].mxu0 %v259
    %v361 = vpop.f32.mrb[0].mxu0
    %v362 = vadd.f32 0.0, %v361
    %v363 = vpop.f32.mrb[0].mxu0
    %v364 = vpop.f32.mrb[0].mxu0
    %v365 = vadd.f32 0.0, %v364
    %v366 = vpop.f32.mrb[0].mxu0
    %367 = vmatprep.mubr.bf16.mxu0 0
    %368 = vmatmul.mubr.bf16.gmra.mrb[0].mxu0 %v260
    %v369 = vpop.f32.mrb[0].mxu0
    %v370 = vadd.f32 0.0, %v369
    %v371 = vpop.f32.mrb[0].mxu0
    %v372 = vpop.f32.mrb[0].mxu0
    %v373 = vadd.f32 0.0, %v372
    %v374 = vpop.f32.mrb[0].mxu0
    %375 = vmatprep.mubr.bf16.mxu0 0
    %376 = vmatmul.mubr.bf16.gmra.mrb[0].mxu0 %v261
    %v377 = vpop.f32.mrb[0].mxu0
    %v378 = vadd.f32 0.0, %v377
    %v379 = vpop.f32.mrb[0].mxu0
    %v380 = vpop.f32.mrb[0].mxu0
    %v381 = vadd.f32 0.0, %v380
    %v382 = vpop.f32.mrb[0].mxu0
    %383 = vmatprep.mubr.bf16.mxu0 0
    %384 = vmatmul.mubr.bf16.gmra.mrb[0].mxu0 %v262
    %v385 = vpop.f32.mrb[0].mxu0
    %v386 = vadd.f32 0.0, %v385
    %v387 = vpop.f32.mrb[0].mxu0
    %v388 = vpop.f32.mrb[0].mxu0
    %v389 = vadd.f32 0.0, %v388
    %v390 = vpop.f32.mrb[0].mxu0
    %391 = vdwg.mxu0
    %v392 = vadd.f32 %v251, %v362
    %v393 = vadd.f32 %v252, %v365
    %v394 = vadd.f32 %v253, %v370
    %v395 = vadd.f32 %v254, %v373
    %v396 = vadd.f32 %v255, %v378
    %v397 = vadd.f32 %v256, %v381
    %v398 = vadd.f32 %v257, %v386
    %v399 = vadd.f32 %v258, %v389
    %400 = vst [vmem:[#allocation2] sm:$0xff] %v392
    %401 = vst [vmem:[#allocation2 + $0x8] sm:$0xff] %v393
    %402 = vst [vmem:[#allocation2 + $0x10] sm:$0xff] %v394
    %403 = vst [vmem:[#allocation2 + $0x18] sm:$0xff] %v395
    %404 = vst [vmem:[#allocation2 + $0x20] sm:$0xff] %v396
    %405 = vst [vmem:[#allocation2 + $0x28] sm:$0xff] %v397
    %406 = vst [vmem:[#allocation2 + $0x30] sm:$0xff] %v398
    %407 = vst [vmem:[#allocation2 + $0x38] sm:$0xff] %v399
    // Predicated region
    $region38: #{tpu_custom_call.1} parent=1 // pred_check
      %p408 = pneg %p63
    $region39: #{tpu_custom_call.1} parent=1 // pred_check_branch
      %410 = sbr.rel (%p408) target = $region41
    $region40: #{tpu_custom_call.1} parent=1 // pred_region
      %v411 = vld [vmem:[#allocation2] sm:$0xff]
      %v412 = vld [vmem:[#allocation2 + $0x8] sm:$0xff]
      %v413 = vld [vmem:[#allocation2 + $0x10] sm:$0xff]
      %v414 = vld [vmem:[#allocation2 + $0x18] sm:$0xff]
      %v415 = vld [vmem:[#allocation2 + $0x20] sm:$0xff]
      %v416 = vld [vmem:[#allocation2 + $0x28] sm:$0xff]
      %v417 = vld [vmem:[#allocation2 + $0x30] sm:$0xff]
      %v418 = vld [vmem:[#allocation2 + $0x38] sm:$0xff]
      %v419 = vld [vmem:[%s4] sm:$0x1]
      %v421 = vlaneseq
      %v422 = vshrl.u32 %v421, 7
      %v423 = vsub.s32 0, %v422
      %v424 = vrot.slane %v419, %v423
      %v426 = vadd.f32 %v411, %v424
      %v427 = vadd.f32 %v412, %v424
      %v428 = vadd.f32 %v413, %v424
      %v429 = vadd.f32 %v414, %v424
      %v430 = vadd.f32 %v415, %v424
      %v431 = vadd.f32 %v416, %v424
      %v432 = vadd.f32 %v417, %v424
      %v433 = vadd.f32 %v418, %v424
      %434 = vst [vmem:[#allocation9] sm:$0xff] %v426
      %435 = vst [vmem:[#allocation9 + $0x8] sm:$0xff] %v427
      %436 = vst [vmem:[#allocation9 + $0x10] sm:$0xff] %v428
      %437 = vst [vmem:[#allocation9 + $0x18] sm:$0xff] %v429
      %438 = vst [vmem:[#allocation9 + $0x20] sm:$0xff] %v430
      %439 = vst [vmem:[#allocation9 + $0x28] sm:$0xff] %v431
      %440 = vst [vmem:[#allocation9 + $0x30] sm:$0xff] %v432
      %441 = vst [vmem:[#allocation9 + $0x38] sm:$0xff] %v433
    $region41: #{tpu_custom_call.1} parent=1 // pred_fallthru
      _
    // Predicated region
    $region42: #{tpu_custom_call.1} parent=1 // pred_check
      _
    $region43: #{tpu_custom_call.1} parent=1 // pred_check_branch
      %443 = sbr.rel (0) target = $region45
    $region44: #{tpu_custom_call.1} parent=1 // pred_region
      %s445 = ssub.s32 1024, 1024
      %446 = vsyncadd [#allocation5], %s445
      %s447 = sshll.u32 [#allocation9], 4
      %s448 = int_to_ptr.vmem [resolvable:$true] %s447
      %453 = dma.vmem_to_hbm [thread:$0]  %s448, 1024, %s5, [#allocation5], 128, 128, 8
    $region45: #{tpu_custom_call.1} parent=1 // pred_fallthru
      _
    // Predicated region
    $region46: #{tpu_custom_call.1} parent=1 // pred_check
      _
    $region47: #{tpu_custom_call.1} parent=1 // pred_check_branch
      %455 = sbr.rel (0) target = $region49
    $region48: #{tpu_custom_call.1} parent=1 // pred_region
      %456 = dma.done [#allocation5], 1024
    $region49: #{tpu_custom_call.1} parent=1 // pred_fallthru
      _
    %457 = vsyncpa [#allocation4], 1
    %458 = vsyncpa [#allocation7], 1
    %459 = vsyncpa [#allocation5], 1

</llo_original>
